<compile_context>
chip_gen: v6e
topology: v6e:2x2x1
jax: 0.10.0
libtpu: 0.0.40
codegen_flags: <defaults>
</compile_context>

<pallas_src>
import jax
import jax.numpy as jnp
from jax.experimental import pallas as pl
from jax.experimental.pallas import tpu as pltpu

H1, H2, H3 = 256, 128, 32


def _round_up(x, m):
    return (x + m - 1) // m * m


def _mlp_kernel(x_ref, w1_ref, b1_ref, w2_ref, b2_ref, w3_ref, b3_ref,
                o_ref, acc_ref):
    k = pl.program_id(1)

    @pl.when(k == 0)
    def _init():
        acc_ref[...] = jnp.zeros_like(acc_ref)

    # Layer-1 partial product for this embedding chunk (f32 accumulation).
    x = x_ref[...].astype(w1_ref.dtype)
    acc_ref[...] += jnp.dot(x, w1_ref[...], preferred_element_type=jnp.float32)

    @pl.when(k == pl.num_programs(1) - 1)
    def _finalize():
        h1 = jnp.tanh(acc_ref[...] + b1_ref[...].astype(jnp.float32))
        h2 = jnp.tanh(
            jnp.dot(h1.astype(w2_ref.dtype), w2_ref[...],
                    preferred_element_type=jnp.float32)
            + b2_ref[...].astype(jnp.float32))
        out = (jnp.dot(h2.astype(w3_ref.dtype), w3_ref[...],
                       preferred_element_type=jnp.float32)
               + b3_ref[...].astype(jnp.float32))
        # TODO(synk): H3=32 (<128 lanes) -> masked store; lane-dense repack is
        # a minor further win not applied here.
        o_ref[...] = out.astype(o_ref.dtype)


def _choose_tiles(batch, emb):
    b8 = _round_up(max(batch, 1), 8)
    if b8 <= 8:
        block_b = 8
    elif b8 <= 1024:
        # Split into >=2 grid steps so both v7x TensorCores get work;
        # cap the tile at 512 rows.
        block_b = min(512, _round_up(pl.cdiv(b8, 2), 8))
    else:
        block_b = 512
    b_pad = _round_up(b8, block_b)

    if emb <= 2048:
        block_e, e_pad = emb, emb            # full-extent block, no K-tiling
    else:
        block_e = 512                        # K-tile huge BOW vocabularies
        e_pad = _round_up(emb, block_e)
    return block_b, b_pad, block_e, e_pad


@jax.jit
def question_encoder_bow(question, params):
    """Forward pass of QuestionEncoder_BOW as a fused Pallas TPU kernel.

    question: (..., E) array, any float/int dtype (cast in-kernel, like .float()).
    params: dict with w1 (E,256), b1 (1,256), w2 (256,128), b2 (1,128),
            w3 (128,32), b3 (1,32). Weights may be float32 or bfloat16
            (f32 accumulation either way).
    Returns (..., 32) float32.
    """
    w1, b1 = params["w1"], params["b1"]
    w2, b2 = params["w2"], params["b2"]
    w3, b3 = params["w3"], params["b3"]

    orig_shape = question.shape
    emb = orig_shape[-1]
    x = question.reshape(-1, emb)
    batch = x.shape[0]

    block_b, b_pad, block_e, e_pad = _choose_tiles(batch, emb)

    # Zero padding is mathematically inert for the accumulation; padded output
    # rows are sliced off below.
    if b_pad != batch or e_pad != emb:
        x = jnp.pad(x, ((0, b_pad - batch), (0, e_pad - emb)))
    if e_pad != emb:
        w1 = jnp.pad(w1, ((0, e_pad - emb), (0, 0)))

    grid = (b_pad // block_b, e_pad // block_e)

    w_bytes = (w1.size * w1.dtype.itemsize + w2.size * w2.dtype.itemsize +
               w3.size * w3.dtype.itemsize)
    x_bytes = b_pad * e_pad * x.dtype.itemsize
    out_bytes = b_pad * H3 * 4
    cost = pl.CostEstimate(
        flops=2 * b_pad * (e_pad * H1 + H1 * H2 + H2 * H3),
        transcendentals=b_pad * (H1 + H2),
        bytes_accessed=x_bytes + w_bytes + out_bytes,
    )

    # Rough VMEM footprint: double-buffered tiles + f32 accumulator scratch.
    est = (2 * block_b * block_e * x.dtype.itemsize
           + 2 * block_e * H1 * w1.dtype.itemsize
           + 2 * (H1 * H2 + H2 * H3 + H1 + H2 + H3) * w2.dtype.itemsize
           + 2 * block_b * H3 * 4
           + block_b * H1 * 4)
    vmem_limit = int(min(48 * 2**20, max(32 * 2**20, 2 * est)))

    out = pl.pallas_call(
        _mlp_kernel,
        out_shape=jax.ShapeDtypeStruct((b_pad, H3), jnp.float32),
        grid_spec=pltpu.PrefetchScalarGridSpec(
            num_scalar_prefetch=0,
            grid=grid,
            in_specs=[
                pl.BlockSpec((block_b, block_e), lambda i, k: (i, k)),  # x tile
                pl.BlockSpec((block_e, H1), lambda i, k: (k, 0)),       # w1 chunk
                pl.BlockSpec((1, H1), lambda i, k: (0, 0)),             # b1
                pl.BlockSpec((H1, H2), lambda i, k: (0, 0)),            # w2
                pl.BlockSpec((1, H2), lambda i, k: (0, 0)),             # b2
                pl.BlockSpec((H2, H3), lambda i, k: (0, 0)),            # w3
                pl.BlockSpec((1, H3), lambda i, k: (0, 0)),             # b3
            ],
            out_specs=pl.BlockSpec((block_b, H3), lambda i, k: (i, 0)),
            scratch_shapes=[pltpu.VMEM((block_b, H1), jnp.float32)],
        ),
        compiler_params=pltpu.CompilerParams(
            dimension_semantics=("parallel", "arbitrary"),
            vmem_limit_bytes=vmem_limit,
        ),
        cost_estimate=cost,
    )(x, w1, b1, w2, b2, w3, b3)

    out = out[:batch]
    return out.reshape(*orig_shape[:-1], H3)


def init_params(key, embedding_size, dtype=jnp.float32):
    """Deterministic synthetic init (PyTorch-style uniform fan-in bounds)."""
    dims = [(embedding_size, H1), (H1, H2), (H2, H3)]
    params = {}
    for idx, (fan_in, fan_out) in enumerate(dims, start=1):
        key, kw, kb = jax.random.split(key, 3)
        bound = 1.0 / jnp.sqrt(fan_in)
        params[f"w{idx}"] = jax.random.uniform(
            kw, (fan_in, fan_out), jnp.float32, -bound, bound).astype(dtype)
        params[f"b{idx}"] = jax.random.uniform(
            kb, (1, fan_out), jnp.float32, -bound, bound).astype(dtype)
    return params


def _reference(question, params):
    x = question.reshape(-1, question.shape[-1]).astype(jnp.float32)
    h = jnp.tanh(x @ params["w1"].astype(jnp.float32)
                 + params["b1"].astype(jnp.float32))
    h = jnp.tanh(h @ params["w2"].astype(jnp.float32)
                 + params["b2"].astype(jnp.float32))
    out = h @ params["w3"].astype(jnp.float32) + params["b3"].astype(jnp.float32)
    return out.reshape(*question.shape[:-1], H3)


if __name__ == "__main__":
    embedding_size = 32
    batch = 10   # not a multiple of 8 -> exercises padding + 2-step grid

    key = jax.random.PRNGKey(0)
    key, k_in = jax.random.split(key)
    question = jax.random.normal(k_in, (batch, embedding_size), jnp.float32)
    params = init_params(key, embedding_size, dtype=jnp.float32)

    out = question_encoder_bow(question, params)
    jax.block_until_ready(out)

    ref = _reference(question, params)
    assert out.shape == (batch, H3)
    assert jnp.allclose(out, ref, atol=1e-5, rtol=1e-5), "mismatch vs reference"

    print("KERNEL_OK")
</pallas_src>

<mosaic_0001>
module attributes {stable_mosaic.version = 11 : i64} {
  func.func @_mlp_kernel(%arg0: i32, %arg1: i32, %arg2: memref<8x32xf32, #tpu.memory_space<vmem>>, %arg3: memref<32x256xf32, #tpu.memory_space<vmem>>, %arg4: memref<1x256xf32, #tpu.memory_space<vmem>>, %arg5: memref<256x128xf32, #tpu.memory_space<vmem>>, %arg6: memref<1x128xf32, #tpu.memory_space<vmem>>, %arg7: memref<128x32xf32, #tpu.memory_space<vmem>>, %arg8: memref<1x32xf32, #tpu.memory_space<vmem>>, %arg9: memref<8x32xf32, #tpu.memory_space<vmem>>, %arg10: memref<8x256xf32, #tpu.memory_space<vmem>>) attributes {dimension_semantics = [#tpu.dimension_semantics<parallel>, #tpu.dimension_semantics<arbitrary>], iteration_bounds = array<i64: 2, 1>, scalar_prefetch = 0 : i64, scratch_operands = 1 : i64, tpu.core_type = #tpu.core_type<tc>, window_params = [{transform_indices = @transform_0, window_bounds = array<i64: 8, 32>}, {transform_indices = @transform_1, window_bounds = array<i64: 32, 256>}, {pipeline_mode = #tpu.pipeline_mode<synchronous>, transform_indices = @transform_2, window_bounds = array<i64: 1, 256>}, {pipeline_mode = #tpu.pipeline_mode<synchronous>, transform_indices = @transform_3, window_bounds = array<i64: 256, 128>}, {pipeline_mode = #tpu.pipeline_mode<synchronous>, transform_indices = @transform_4, window_bounds = array<i64: 1, 128>}, {pipeline_mode = #tpu.pipeline_mode<synchronous>, transform_indices = @transform_5, window_bounds = array<i64: 128, 32>}, {pipeline_mode = #tpu.pipeline_mode<synchronous>, transform_indices = @transform_6, window_bounds = array<i64: 1, 32>}, {transform_indices = @transform_7, window_bounds = array<i64: 8, 32>}]} {
    %c0_i32 = arith.constant 0 : i32
    %0 = arith.cmpi eq, %arg1, %c0_i32 : i32
    %1 = arith.extui %0 : i1 to i32
    %c0_i32_0 = arith.constant 0 : i32
    %2 = arith.cmpi ne, %1, %c0_i32_0 : i32
    scf.if %2 {
      %cst_10 = arith.constant 0.000000e+00 : f32
      %12 = vector.broadcast %cst_10 : f32 to vector<8x256xf32>
      %c0_11 = arith.constant 0 : index
      %c0_12 = arith.constant 0 : index
      %13 = vector.load %arg10[%c0_11, %c0_12] : memref<8x256xf32, #tpu.memory_space<vmem>>, vector<8x256xf32>
      tpu.vector_store %arg10[%c0_11, %c0_12], %12 {strides = array<i32>} : memref<8x256xf32, #tpu.memory_space<vmem>>, vector<8x256xf32>,
    } else {
    }
    %c0 = arith.constant 0 : index
    %c0_1 = arith.constant 0 : index
    %3 = vector.load %arg2[%c0, %c0_1] : memref<8x32xf32, #tpu.memory_space<vmem>>, vector<8x32xf32>
    %c0_2 = arith.constant 0 : index
    %c0_3 = arith.constant 0 : index
    %4 = vector.load %arg10[%c0_2, %c0_3] : memref<8x256xf32, #tpu.memory_space<vmem>>, vector<8x256xf32>
    %c0_4 = arith.constant 0 : index
    %c0_5 = arith.constant 0 : index
    %5 = vector.load %arg3[%c0_4, %c0_5] : memref<32x256xf32, #tpu.memory_space<vmem>>, vector<32x256xf32>
    %cst = arith.constant dense<0.000000e+00> : vector<8x256xf32>
    %6 = tpu.matmul %3, %5, %cst {dimension_numbers = #tpu.dot_dimension_numbers<[1], [0], [0], [1], [0, 0, 1, 1], [], []>} : vector<8x32xf32>, vector<32x256xf32>, vector<8x256xf32> -> vector<8x256xf32>
    %7 = arith.addf %4, %6 : vector<8x256xf32>
    %c0_6 = arith.constant 0 : index
    %c0_7 = arith.constant 0 : index
    %8 = vector.load %arg10[%c0_6, %c0_7] : memref<8x256xf32, #tpu.memory_space<vmem>>, vector<8x256xf32>
    tpu.vector_store %arg10[%c0_6, %c0_7], %7 {strides = array<i32>} : memref<8x256xf32, #tpu.memory_space<vmem>>, vector<8x256xf32>,
    %c0_i32_8 = arith.constant 0 : i32
    %9 = arith.cmpi eq, %arg1, %c0_i32_8 : i32
    %10 = arith.extui %9 : i1 to i32
    %c0_i32_9 = arith.constant 0 : i32
    %11 = arith.cmpi ne, %10, %c0_i32_9 : i32
    scf.if %11 {
      %c0_10 = arith.constant 0 : index
      %c0_11 = arith.constant 0 : index
      %12 = vector.load %arg10[%c0_10, %c0_11] : memref<8x256xf32, #tpu.memory_space<vmem>>, vector<8x256xf32>
      %c0_12 = arith.constant 0 : index
      %c0_13 = arith.constant 0 : index
      %13 = vector.load %arg4[%c0_12, %c0_13] : memref<1x256xf32, #tpu.memory_space<vmem>>, vector<1x256xf32>
      %14 = vector.broadcast %13 : vector<1x256xf32> to vector<8x256xf32>
      %15 = arith.addf %12, %14 : vector<8x256xf32>
      %16 = math.tanh %15 : vector<8x256xf32>
      %c0_14 = arith.constant 0 : index
      %c0_15 = arith.constant 0 : index
      %17 = vector.load %arg5[%c0_14, %c0_15] : memref<256x128xf32, #tpu.memory_space<vmem>>, vector<256x128xf32>
      %cst_16 = arith.constant dense<0.000000e+00> : vector<8x128xf32>
      %18 = tpu.matmul %16, %17, %cst_16 {dimension_numbers = #tpu.dot_dimension_numbers<[1], [0], [0], [1], [0, 0, 1, 1], [], []>} : vector<8x256xf32>, vector<256x128xf32>, vector<8x128xf32> -> vector<8x128xf32>
      %c0_17 = arith.constant 0 : index
      %c0_18 = arith.constant 0 : index
      %19 = vector.load %arg6[%c0_17, %c0_18] : memref<1x128xf32, #tpu.memory_space<vmem>>, vector<1x128xf32>
      %20 = vector.broadcast %19 : vector<1x128xf32> to vector<8x128xf32>
      %21 = arith.addf %18, %20 : vector<8x128xf32>
      %22 = math.tanh %21 : vector<8x128xf32>
      %c0_19 = arith.constant 0 : index
      %c0_20 = arith.constant 0 : index
      %23 = vector.load %arg7[%c0_19, %c0_20] : memref<128x32xf32, #tpu.memory_space<vmem>>, vector<128x32xf32>
      %cst_21 = arith.constant dense<0.000000e+00> : vector<8x32xf32>
      %24 = tpu.matmul %22, %23, %cst_21 {dimension_numbers = #tpu.dot_dimension_numbers<[1], [0], [0], [1], [0, 0, 1, 1], [], []>} : vector<8x128xf32>, vector<128x32xf32>, vector<8x32xf32> -> vector<8x32xf32>
      %c0_22 = arith.constant 0 : index
      %c0_23 = arith.constant 0 : index
      %25 = vector.load %arg8[%c0_22, %c0_23] : memref<1x32xf32, #tpu.memory_space<vmem>>, vector<1x32xf32>
      %26 = vector.broadcast %25 : vector<1x32xf32> to vector<8x32xf32>
      %27 = arith.addf %24, %26 : vector<8x32xf32>
      %c0_24 = arith.constant 0 : index
      %c0_25 = arith.constant 0 : index
      %28 = vector.load %arg9[%c0_24, %c0_25] : memref<8x32xf32, #tpu.memory_space<vmem>>, vector<8x32xf32>
      tpu.vector_store %arg9[%c0_24, %c0_25], %27 {strides = array<i32>} : memref<8x32xf32, #tpu.memory_space<vmem>>, vector<8x32xf32>,
    } else {
    }
    return
  }
  func.func @transform_0(%arg0: i32, %arg1: i32) -> (i32, i32) {
    %c0_i32 = arith.constant 0 : i32
    return %arg0, %arg1 : i32, i32
  }
  func.func @transform_1(%arg0: i32, %arg1: i32) -> (i32, i32) {
    %c0_i32 = arith.constant 0 : i32
    %c0_i32_0 = arith.constant 0 : i32
    return %arg1, %c0_i32 : i32, i32
  }
  func.func @transform_2(%arg0: i32, %arg1: i32) -> (i32, i32) {
    %c0_i32 = arith.constant 0 : i32
    %c0_i32_0 = arith.constant 0 : i32
    %c0_i32_1 = arith.constant 0 : i32
    return %c0_i32, %c0_i32_0 : i32, i32
  }
  func.func @transform_3(%arg0: i32, %arg1: i32) -> (i32, i32) {
    %c0_i32 = arith.constant 0 : i32
    %c0_i32_0 = arith.constant 0 : i32
    %c0_i32_1 = arith.constant 0 : i32
    return %c0_i32, %c0_i32_0 : i32, i32
  }
  func.func @transform_4(%arg0: i32, %arg1: i32) -> (i32, i32) {
    %c0_i32 = arith.constant 0 : i32
    %c0_i32_0 = arith.constant 0 : i32
    %c0_i32_1 = arith.constant 0 : i32
    return %c0_i32, %c0_i32_0 : i32, i32
  }
  func.func @transform_5(%arg0: i32, %arg1: i32) -> (i32, i32) {
    %c0_i32 = arith.constant 0 : i32
    %c0_i32_0 = arith.constant 0 : i32
    %c0_i32_1 = arith.constant 0 : i32
    return %c0_i32, %c0_i32_0 : i32, i32
  }
  func.func @transform_6(%arg0: i32, %arg1: i32) -> (i32, i32) {
    %c0_i32 = arith.constant 0 : i32
    %c0_i32_0 = arith.constant 0 : i32
    %c0_i32_1 = arith.constant 0 : i32
    return %c0_i32, %c0_i32_0 : i32, i32
  }
  func.func @transform_7(%arg0: i32, %arg1: i32) -> (i32, i32) {
    %c0_i32 = arith.constant 0 : i32
    %c0_i32_0 = arith.constant 0 : i32
    return %arg0, %c0_i32 : i32, i32
  }
}

</mosaic_0001>

<llo_original>
// kernel: question_encoder_bow.1
$region0: #{question_encoder_bow.1}
  #allocation0 [shape = 'u32[]', space=smem, size = 0x4, offset = 0x4, fixed_abs, tag = 'smem constant byte address 0x4 - core index']
  #allocation1 [shape = 'u32[144,128]{1,0:T(1,128)}', space=vmem, size = 0x12000, scoped, tag = 'internal scratch']
  #allocation2 [shape = 'f32[8,256]{1,0:T(8,128)}', space=vmem, size = 0x2000, scoped, tag = 'scratch operand']
  %s0 = inlined_call_operand.vmem [shape: f32[16,32], index: 0, kind: input, shape index: {}]
  %s1 = inlined_call_operand.vmem [shape: f32[32,256], index: 1, kind: input, shape index: {}]
  %s2 = inlined_call_operand.vmem [shape: f32[1,256], index: 2, kind: input, shape index: {}]
  %s3 = inlined_call_operand.hbm [shape: f32[256,128], index: 3, kind: input, shape index: {}]
  %s4 = inlined_call_operand.vmem [shape: f32[1,128], index: 4, kind: input, shape index: {}]
  %s5 = inlined_call_operand.vmem [shape: f32[128,32], index: 5, kind: input, shape index: {}]
  %s6 = inlined_call_operand.vmem [shape: f32[1,32], index: 6, kind: input, shape index: {}]
  %s7 = inlined_call_operand.hbm [shape: f32[16,32], index: 7, kind: output, shape index: {}]
  %s8 = sld [smem:[#allocation0]]
  $region73: #{question_encoder_bow.1} parent=0
    _
  %s10 = ssub.s32 1, %s8
  %s11 = scalar_select 0, %s10, %s8
  $region1: #{question_encoder_bow.1} parent=0
    #allocation3 [shape = 'u8[131072]{0}', space=vmem, size = 0x20000, scoped, tag = 'input window, operand 3, single buffered']
    #allocation4 [shape = 's32[2]{0}', space=sflag, size = 0x8, scoped, tag = 'scoped memory for question_encoder_bow.1']
    #allocation5 [shape = 's32[2]{0}', space=sflag, size = 0x8, scoped, tag = 'scoped memory for question_encoder_bow.1']
    #allocation6 [shape = 'u8[8192]{0}', space=vmem, size = 0x2000, scoped, tag = 'output window, operand 0']
    %12 = vsyncpa [#allocation4], 0
    %13 = vsyncpa [#allocation5], 0
    %s14 = scalar_lea.sflag [#allocation5], 1
    %15 = vsyncpa %s14, 0
    loop: start=0, step=1, limit=4
    $region2: #{question_encoder_bow.1} parent=1 // loop_pre_header
      _
    $region3: #{question_encoder_bow.1} parent=1 // loop_header
      %s17 = sphi 0, %s21
      %p18 = scmp.ge.s32.totalorder %s17, 4
      %s24 = sphi 0, %s36
      %s25 = sphi 0, %s32
      %s26 = sphi 0, %s24
      %s27 = sphi 0, %s25
      %s28 = sphi 0, %s26
      %s29 = sphi 0, %s27
      %s41 = sphi 0, %s43
      %s44 = sphi 0, %s41
      %s45 = sphi 0, %s44
      %s61 = sphi 0, %s45
      %s67 = sphi 0, %s69
      %s70 = sphi 0, %s67
      %s71 = sphi 0, %s70
      %s87 = sphi 0, %s71
      %s91 = sphi 0, %s91
      %s93 = sphi 0, %s91
      %s94 = sphi 0, %s93
      %s108 = sphi 0, %s94
      %s112 = sphi 0, %s112
      %s114 = sphi 0, %s112
      %s115 = sphi 0, %s114
      %s129 = sphi 0, %s115
      %s133 = sphi 0, %s133
      %s135 = sphi 0, %s133
      %s136 = sphi 0, %s135
      %s150 = sphi 0, %s136
      %s154 = sphi 0, %s154
      %s156 = sphi 0, %s154
      %s157 = sphi 0, %s156
      %s171 = sphi 0, %s157
      %s175 = sphi 0, %s175
      %s177 = sphi 0, %s175
      %s178 = sphi 0, %s177
      %s192 = sphi 0, %s178
      %s198 = sphi 0, %s200
      %s201 = sphi 0, %s198
      %s202 = sphi 0, %s201
      %s218 = sphi 0, %s202
    $region4: #{question_encoder_bow.1} parent=1 // loop_header_branch
      %20 = sbr.rel (%p18) target = $region8
    $region5: #{question_encoder_bow.1} parent=1 // loop_body
      %s22 = ssub.s32 %s17, 1
      %s23 = ssub.s32 %s17, 2
      %s30 = sadd.s32 1, %s25
      %p31 = scmp.ge.s32.totalorder %s30, 1
      %s32 = scalar_select %p31, 0, %s30
      %s33 = sadd.s32 1, %s24
      %s34 = scalar_select %p31, %s33, %s24
      %p35 = scmp.ge.s32.totalorder %s34, 2
      %s36 = scalar_select %p35, 0, %s34
      %s37 = ssub.s32 %s24, %s36
      %s38 = ssub.s32 %s25, %s32
      %s39 = sor.u32 %s37, %s38
      %p40 = scmp.eq.s32.totalorder %s39, 0
      %s42 = sadd.s32 %s41, 1
      %s43 = scalar_select %p40, %s41, %s42
      %p46 = pneg %p40
      %p47 = scmp.eq.s32.totalorder %s17, 1
      %p48 = por %p46, %p47
      %p49 = scmp.ne.s32.totalorder %s41, %s44
      %p50 = scmp.eq.s32.totalorder %s17, 0
      %p51 = por %p49, %p50
      %p52 = scmp.ne.s32.totalorder %s41, %s44
      %p53 = scmp.eq.s32.totalorder %s22, 1
      %p54 = por %p52, %p53
      %p55 = scmp.ne.s32.totalorder %s44, %s45
      %p56 = scmp.eq.s32.totalorder %s22, 0
      %p57 = por %p55, %p56
      %p58 = scmp.ne.s32.totalorder %s44, %s45
      %p59 = scmp.eq.s32.totalorder %s23, 1
      %p60 = por %p58, %p59
      %p62 = scmp.ne.s32.totalorder %s45, %s61
      %p63 = scmp.eq.s32.totalorder %s23, 0
      %p64 = por %p62, %p63
      %s65 = ssub.s32 %s25, %s32
      %p66 = scmp.eq.s32.totalorder %s65, 0
      %s68 = sadd.s32 %s67, 1
      %s69 = scalar_select %p66, %s67, %s68
      %p72 = pneg %p66
      %p73 = scmp.eq.s32.totalorder %s17, 1
      %p74 = por %p72, %p73
      %p75 = scmp.ne.s32.totalorder %s67, %s70
      %p76 = scmp.eq.s32.totalorder %s17, 0
      %p77 = por %p75, %p76
      %p78 = scmp.ne.s32.totalorder %s67, %s70
      %p79 = scmp.eq.s32.totalorder %s22, 1
      %p80 = por %p78, %p79
      %p81 = scmp.ne.s32.totalorder %s70, %s71
      %p82 = scmp.eq.s32.totalorder %s22, 0
      %p83 = por %p81, %p82
      %p84 = scmp.ne.s32.totalorder %s70, %s71
      %p85 = scmp.eq.s32.totalorder %s23, 1
      %p86 = por %p84, %p85
      %p88 = scmp.ne.s32.totalorder %s71, %s87
      %p89 = scmp.eq.s32.totalorder %s23, 0
      %p90 = por %p88, %p89
      %s92 = sadd.s32 %s91, 1
      %p95 = scmp.eq.s32.totalorder %s17, 1
      %p96 = scmp.ne.s32.totalorder %s91, %s93
      %p97 = scmp.eq.s32.totalorder %s17, 0
      %p98 = por %p96, %p97
      %p99 = scmp.ne.s32.totalorder %s91, %s93
      %p100 = scmp.eq.s32.totalorder %s22, 1
      %p101 = por %p99, %p100
      %p102 = scmp.ne.s32.totalorder %s93, %s94
      %p103 = scmp.eq.s32.totalorder %s22, 0
      %p104 = por %p102, %p103
      %p105 = scmp.ne.s32.totalorder %s93, %s94
      %p106 = scmp.eq.s32.totalorder %s23, 1
      %p107 = por %p105, %p106
      %p109 = scmp.ne.s32.totalorder %s94, %s108
      %p110 = scmp.eq.s32.totalorder %s23, 0
      %p111 = por %p109, %p110
      %s113 = sadd.s32 %s112, 1
      %p116 = scmp.eq.s32.totalorder %s17, 1
      %p117 = scmp.ne.s32.totalorder %s112, %s114
      %p118 = scmp.eq.s32.totalorder %s17, 0
      %p119 = por %p117, %p118
      %p120 = scmp.ne.s32.totalorder %s112, %s114
      %p121 = scmp.eq.s32.totalorder %s22, 1
      %p122 = por %p120, %p121
      %p123 = scmp.ne.s32.totalorder %s114, %s115
      %p124 = scmp.eq.s32.totalorder %s22, 0
      %p125 = por %p123, %p124
      %p126 = scmp.ne.s32.totalorder %s114, %s115
      %p127 = scmp.eq.s32.totalorder %s23, 1
      %p128 = por %p126, %p127
      %p130 = scmp.ne.s32.totalorder %s115, %s129
      %p131 = scmp.eq.s32.totalorder %s23, 0
      %p132 = por %p130, %p131
      %s134 = sadd.s32 %s133, 1
      %p137 = scmp.eq.s32.totalorder %s17, 1
      %p138 = scmp.ne.s32.totalorder %s133, %s135
      %p139 = scmp.eq.s32.totalorder %s17, 0
      %p140 = por %p138, %p139
      %p141 = scmp.ne.s32.totalorder %s133, %s135
      %p142 = scmp.eq.s32.totalorder %s22, 1
      %p143 = por %p141, %p142
      %p144 = scmp.ne.s32.totalorder %s135, %s136
      %p145 = scmp.eq.s32.totalorder %s22, 0
      %p146 = por %p144, %p145
      %p147 = scmp.ne.s32.totalorder %s135, %s136
      %p148 = scmp.eq.s32.totalorder %s23, 1
      %p149 = por %p147, %p148
      %p151 = scmp.ne.s32.totalorder %s136, %s150
      %p152 = scmp.eq.s32.totalorder %s23, 0
      %p153 = por %p151, %p152
      %s155 = sadd.s32 %s154, 1
      %p158 = scmp.eq.s32.totalorder %s17, 1
      %p159 = scmp.ne.s32.totalorder %s154, %s156
      %p160 = scmp.eq.s32.totalorder %s17, 0
      %p161 = por %p159, %p160
      %p162 = scmp.ne.s32.totalorder %s154, %s156
      %p163 = scmp.eq.s32.totalorder %s22, 1
      %p164 = por %p162, %p163
      %p165 = scmp.ne.s32.totalorder %s156, %s157
      %p166 = scmp.eq.s32.totalorder %s22, 0
      %p167 = por %p165, %p166
      %p168 = scmp.ne.s32.totalorder %s156, %s157
      %p169 = scmp.eq.s32.totalorder %s23, 1
      %p170 = por %p168, %p169
      %p172 = scmp.ne.s32.totalorder %s157, %s171
      %p173 = scmp.eq.s32.totalorder %s23, 0
      %p174 = por %p172, %p173
      %s176 = sadd.s32 %s175, 1
      %p179 = scmp.eq.s32.totalorder %s17, 1
      %p180 = scmp.ne.s32.totalorder %s175, %s177
      %p181 = scmp.eq.s32.totalorder %s17, 0
      %p182 = por %p180, %p181
      %p183 = scmp.ne.s32.totalorder %s175, %s177
      %p184 = scmp.eq.s32.totalorder %s22, 1
      %p185 = por %p183, %p184
      %p186 = scmp.ne.s32.totalorder %s177, %s178
      %p187 = scmp.eq.s32.totalorder %s22, 0
      %p188 = por %p186, %p187
      %p189 = scmp.ne.s32.totalorder %s177, %s178
      %p190 = scmp.eq.s32.totalorder %s23, 1
      %p191 = por %p189, %p190
      %p193 = scmp.ne.s32.totalorder %s178, %s192
      %p194 = scmp.eq.s32.totalorder %s23, 0
      %p195 = por %p193, %p194
      %s196 = ssub.s32 %s24, %s36
      %p197 = scmp.eq.s32.totalorder %s196, 0
      %s199 = sadd.s32 %s198, 1
      %s200 = scalar_select %p197, %s198, %s199
      %p203 = pneg %p197
      %p204 = scmp.eq.s32.totalorder %s17, 1
      %p205 = por %p203, %p204
      %p206 = scmp.ne.s32.totalorder %s198, %s201
      %p207 = scmp.eq.s32.totalorder %s17, 0
      %p208 = por %p206, %p207
      %p209 = scmp.ne.s32.totalorder %s198, %s201
      %p210 = scmp.eq.s32.totalorder %s22, 1
      %p211 = por %p209, %p210
      %p212 = scmp.ne.s32.totalorder %s201, %s202
      %p213 = scmp.eq.s32.totalorder %s22, 0
      %p214 = por %p212, %p213
      %p215 = scmp.ne.s32.totalorder %s201, %s202
      %p216 = scmp.eq.s32.totalorder %s23, 1
      %p217 = por %p215, %p216
      %p219 = scmp.ne.s32.totalorder %s202, %s218
      %p220 = scmp.eq.s32.totalorder %s23, 0
      %p221 = por %p219, %p220
      %p222 = scmp.le.s32.totalorder 1, %s17
      %p223 = scmp.lt.s32.totalorder %s17, 3
      %p224 = pnand %p222, %p223
      %p225 = pneg %p224
      // Predicated region
      $region9: #{question_encoder_bow.1} parent=5 // pred_check
        _
      $region10: #{question_encoder_bow.1} parent=5 // pred_check_branch
        %227 = sbr.rel (%p224) target = $region12
      $region11: #{question_encoder_bow.1} parent=5 // pred_region
        %s228 = ssub.s32 %s17, 1
        // Predicated region
        $region13: #{question_encoder_bow.1} parent=11 // pred_check
          %p229 = pneg %p83
        $region14: #{question_encoder_bow.1} parent=11 // pred_check_branch
          %231 = sbr.rel (%p229) target = $region16
        $region15: #{question_encoder_bow.1} parent=11 // pred_region
          %s232 = smul.u32 4, %s27
          %p233 = scmp.lt.s32.totalorder %s232, 3
          %s234 = scalar_select %p233, %s232, 3
          %s235 = smul.addr %s234, 2
          %s236 = smul.addr %s235, 8
          %s237 = scalar_lea.vmem %s1, %s236
          %s238 = smul.u32 4, %s27
        $region16: #{question_encoder_bow.1} parent=11 // pred_fallthru
          _
        // Predicated region
        $region17: #{question_encoder_bow.1} parent=11 // pred_check
          %p239 = pneg %p104
        $region18: #{question_encoder_bow.1} parent=11 // pred_check_branch
          %241 = sbr.rel (%p239) target = $region20
        $region19: #{question_encoder_bow.1} parent=11 // pred_region
          _
        $region20: #{question_encoder_bow.1} parent=11 // pred_fallthru
          _
        // Predicated region
        $region21: #{question_encoder_bow.1} parent=11 // pred_check
          %p242 = pneg %p125
        $region22: #{question_encoder_bow.1} parent=11 // pred_check_branch
          %244 = sbr.rel (%p242) target = $region24
        $region23: #{question_encoder_bow.1} parent=11 // pred_region
          %s246 = ssub.s32 4096, 4096
          %247 = vsyncadd [#allocation4], %s246
          %s248 = sshll.u32 [#allocation3], 4
          %s249 = int_to_ptr.vmem [resolvable:$true] %s248
          %254 = dma.hbm_to_vmem [thread:$0]  %s3, 4096, %s249, [#allocation4], 128, 128, 8
        $region24: #{question_encoder_bow.1} parent=11 // pred_fallthru
          _
        // Predicated region
        $region25: #{question_encoder_bow.1} parent=11 // pred_check
          %p255 = pneg %p146
        $region26: #{question_encoder_bow.1} parent=11 // pred_check_branch
          %257 = sbr.rel (%p255) target = $region28
        $region27: #{question_encoder_bow.1} parent=11 // pred_region
          _
        $region28: #{question_encoder_bow.1} parent=11 // pred_fallthru
          _
        // Predicated region
        $region29: #{question_encoder_bow.1} parent=11 // pred_check
          %p258 = pneg %p167
        $region30: #{question_encoder_bow.1} parent=11 // pred_check_branch
          %260 = sbr.rel (%p258) target = $region32
        $region31: #{question_encoder_bow.1} parent=11 // pred_region
          _
        $region32: #{question_encoder_bow.1} parent=11 // pred_fallthru
          _
        // Predicated region
        $region33: #{question_encoder_bow.1} parent=11 // pred_check
          %p261 = pneg %p188
        $region34: #{question_encoder_bow.1} parent=11 // pred_check_branch
          %263 = sbr.rel (%p261) target = $region36
        $region35: #{question_encoder_bow.1} parent=11 // pred_region
          _
        $region36: #{question_encoder_bow.1} parent=11 // pred_fallthru
          _
      $region12: #{question_encoder_bow.1} parent=5 // pred_fallthru
        _
      %p264 = scmp.lt.s32.totalorder %s17, 2
      // Predicated region
      $region37: #{question_encoder_bow.1} parent=5 // pred_check
        %p265 = pneg %p264
      $region38: #{question_encoder_bow.1} parent=5 // pred_check_branch
        %267 = sbr.rel (%p265) target = $region40
      $region39: #{question_encoder_bow.1} parent=5 // pred_region
        // Predicated region
        $region41: #{question_encoder_bow.1} parent=39 // pred_check
          %p268 = pneg %p51
        $region42: #{question_encoder_bow.1} parent=39 // pred_check_branch
          %270 = sbr.rel (%p268) target = $region44
        $region43: #{question_encoder_bow.1} parent=39 // pred_region
          %p271 = scmp.lt.s32.totalorder %s24, 1
          %s272 = scalar_select %p271, %s24, 1
          %p273 = scmp.lt.s32.totalorder %s25, 0
          %s274 = scalar_select %p273, %s25, 0
          %s275 = sadd.s32 %s274, %s272
          %s276 = smul.addr %s275, 8
          %s277 = scalar_lea.vmem %s0, %s276
        $region44: #{question_encoder_bow.1} parent=39 // pred_fallthru
          _
      $region40: #{question_encoder_bow.1} parent=5 // pred_fallthru
        _
      %p278 = scmp.le.s32.totalorder 1, %s17
      %p279 = scmp.lt.s32.totalorder %s17, 3
      %p280 = pnand %p278, %p279
      %p281 = pneg %p280
      // Predicated region
      $region45: #{question_encoder_bow.1} parent=5 // pred_check
        _
      $region46: #{question_encoder_bow.1} parent=5 // pred_check_branch
        %283 = sbr.rel (%p280) target = $region48
      $region47: #{question_encoder_bow.1} parent=5 // pred_region
        %s284 = ssub.s32 %s17, 1
        // Predicated region
        $region49: #{question_encoder_bow.1} parent=47 // pred_check
          %p285 = pneg %p125
        $region50: #{question_encoder_bow.1} parent=47 // pred_check_branch
          %287 = sbr.rel (%p285) target = $region52
        $region51: #{question_encoder_bow.1} parent=47 // pred_region
          %288 = dma.done [#allocation4], 4096
        $region52: #{question_encoder_bow.1} parent=47 // pred_fallthru
          _
        %p289 = scmp.lt.s32.totalorder %s26, 1
        %s290 = scalar_select %p289, %s26, 1
        %p291 = scmp.lt.s32.totalorder %s27, 0
        %s292 = scalar_select %p291, %s27, 0
        %s293 = sadd.s32 %s292, %s290
        %s294 = smul.addr %s293, 8
        %s295 = scalar_lea.vmem %s0, %s294
        %p296 = pneg %p57
        %p297 = pneg %p54
        %s298 = smul.u32 4, %s27
        %p299 = scmp.lt.s32.totalorder %s298, 3
        %s300 = scalar_select %p299, %s298, 3
        %s301 = smul.addr %s300, 2
        %s302 = smul.addr %s301, 8
        %s303 = scalar_lea.vmem %s1, %s302
        %p304 = pneg %p83
        %p305 = pneg %p80
        %p306 = pneg %p104
        %p307 = pneg %p101
        %p308 = pneg %p125
        %p309 = pneg %p122
        %p310 = pneg %p146
        %p311 = pneg %p143
        %p312 = pneg %p167
        %p313 = pneg %p164
        %p314 = pneg %p188
        %p315 = pneg %p185
        %p316 = pneg %p214
        %p317 = pneg %p211
        %s318 = sand.u32 %s201, 1
        %s319 = scalar_lea.sflag [#allocation5], %s318
        %s320 = sand.u32 %s201, 1
        %s321 = smul.addr %s320, 8
        %s322 = scalar_lea.vmem [#allocation6], %s321
        %p323 = scmp.lt.s32.totalorder %s26, 1
        %s324 = scalar_select %p323, %s26, 1
        %p325 = scmp.lt.s32.totalorder %s27, 0
        %s326 = scalar_select %p325, %s27, 0
        %s327 = sadd.s32 %s326, %s324
        %s328 = smul.addr %s327, 8
        %s329 = scalar_lea.vmem %s0, %s328
        %s330 = smul.u32 4, %s27
        %p331 = scmp.lt.s32.totalorder %s330, 3
        %s332 = scalar_select %p331, %s330, 3
        %s333 = smul.addr %s332, 2
        %s334 = smul.addr %s333, 8
        %s335 = scalar_lea.vmem %s1, %s334
        %s336 = smul.u32 4, %s27
        %p337 = scmp.eq.s32.totalorder %s27, 0
        // Predicated region
        $region53: #{question_encoder_bow.1} parent=47 // pred_check
          %p338 = pneg %p337
        $region54: #{question_encoder_bow.1} parent=47 // pred_check_branch
          %340 = sbr.rel (%p338) target = $region56
        $region55: #{question_encoder_bow.1} parent=47 // pred_region
          %341 = vst [vmem:[#allocation2] sm:$0xff] 0.0
          %342 = vst [vmem:[#allocation2 + $0x8] sm:$0xff] 0.0
        $region56: #{question_encoder_bow.1} parent=47 // pred_fallthru
          _
        %v343 = vld [vmem:[%s329] sm:$0xff]
        %v344 = vld [vmem:[#allocation2] sm:$0xff]
        %v345 = vld [vmem:[#allocation2 + $0x8] sm:$0xff]
        %v346 = vld [vmem:[%s335] sm:$0xff]
        %v347 = vld [vmem:[%s335 + $0x8] sm:$0xff]
        %v348 = vld [vmem:[%s335 + $0x10] sm:$0xff]
        %v349 = vld [vmem:[%s335 + $0x18] sm:$0xff]
        %v350 = vld [vmem:[%s335 + $0x20] sm:$0xff]
        %v351 = vld [vmem:[%s335 + $0x28] sm:$0xff]
        %v352 = vld [vmem:[%s335 + $0x30] sm:$0xff]
        %v353 = vld [vmem:[%s335 + $0x38] sm:$0xff]
        %vm354 = vcmask 261120
        %v356 = vsel %vm354, %v343, 0
        %358 = vmatprep.subr.mxu0 0.0
        %359 = vmatpush1.msra.mxu0 0.0
        %360 = vmatprep.subr.mxu0 0.0
        %361 = vmatpush1.msra.mxu0 0.0
        %362 = vmatprep.subr.mxu0 0.0
        %363 = vmatpush1.msra.mxu0 0.0
        %364 = vmatprep.subr.mxu0 0.0
        %365 = vmatpush1.msra.mxu0 0.0
        %366 = vmatprep.subr.mxu0 0.0
        %367 = vmatpush1.msra.mxu0 0.0
        %368 = vmatprep.subr.mxu0 0.0
        %369 = vmatpush1.msra.mxu0 0.0
        %370 = vmatprep.subr.mxu0 0.0
        %371 = vmatpush1.msra.mxu0 0.0
        %372 = vmatprep.subr.mxu0 0.0
        %373 = vmatpush1.msra.mxu0 0.0
        %374 = vmatprep.subr.mxu0 0.0
        %375 = vmatpush1.msra.mxu0 0.0
        %376 = vmatprep.subr.mxu0 0.0
        %377 = vmatpush1.msra.mxu0 0.0
        %378 = vmatprep.subr.mxu0 0.0
        %379 = vmatpush1.msra.mxu0 0.0
        %380 = vmatprep.subr.mxu0 0.0
        %381 = vmatpush1.msra.mxu0 0.0
        %382 = vmatprep.subr.mxu0 %v353
        %383 = vmatpush1.msra.mxu0 %v352
        %384 = vmatprep.subr.mxu0 %v351
        %385 = vmatpush1.msra.mxu0 %v350
        %386 = vmatprep.subr.mxu0 %v349
        %387 = vmatpush1.msra.mxu0 %v348
        %388 = vmatprep.subr.mxu0 %v347
        %389 = vmatpush1.msra.mxu0 %v346
        %390 = vmatprep.subr.mxu0 0.0
        %391 = vmatpush2.msra.mxu0 0.0
        %392 = vmatprep.subr.mxu0 0.0
        %393 = vmatpush2.msra.mxu0 0.0
        %394 = vmatprep.subr.mxu0 0.0
        %395 = vmatpush2.msra.mxu0 0.0
        %396 = vmatprep.subr.mxu0 0.0
        %397 = vmatpush2.msra.mxu0 0.0
        %398 = vmatprep.subr.mxu0 0.0
        %399 = vmatpush2.msra.mxu0 0.0
        %400 = vmatprep.subr.mxu0 0.0
        %401 = vmatpush2.msra.mxu0 0.0
        %402 = vmatprep.subr.mxu0 0.0
        %403 = vmatpush2.msra.mxu0 0.0
        %404 = vmatprep.subr.mxu0 0.0
        %405 = vmatpush2.msra.mxu0 0.0
        %406 = vmatprep.subr.mxu0 0.0
        %407 = vmatpush2.msra.mxu0 0.0
        %408 = vmatprep.subr.mxu0 0.0
        %409 = vmatpush2.msra.mxu0 0.0
        %410 = vmatprep.subr.mxu0 0.0
        %411 = vmatpush2.msra.mxu0 0.0
        %412 = vmatprep.subr.mxu0 0.0
        %413 = vmatpush2.msra.mxu0 0.0
        %414 = vmatprep.subr.mxu0 0.0
        %415 = vmatpush2.msra.mxu0 0.0
        %416 = vmatprep.subr.mxu0 0.0
        %417 = vmatpush2.msra.mxu0 0.0
        %418 = vmatprep.subr.mxu0 0.0
        %419 = vmatpush2.msra.mxu0 0.0
        %420 = vmatprep.subr.mxu0 0.0
        %421 = vmatpush2.msra.mxu0 0.0
        %422 = vmatprep.mubr.f32.mxu0 0.0
        %423 = vmatmul.mubr.f32.gmra.mxu0 %v356
        %v424 = vpop.f32.mrf.mxu0
        %v425 = vadd.f32 0.0, %v424
        %v426 = vpop.f32.mrf.mxu0
        %v427 = vadd.f32 0.0, %v426
        %428 = vdwg.mxu0
        %v429 = vadd.f32 %v344, %v425
        %v430 = vadd.f32 %v345, %v427
        %431 = vst [vmem:[#allocation2] sm:$0xff] %v429
        %432 = vst [vmem:[#allocation2 + $0x8] sm:$0xff] %v430
        // Predicated region
        $region57: #{question_encoder_bow.1} parent=47 // pred_check
          %p433 = pneg %p337
        $region58: #{question_encoder_bow.1} parent=47 // pred_check_branch
          %435 = sbr.rel (%p433) target = $region60
        $region59: #{question_encoder_bow.1} parent=47 // pred_region
          %v436 = vld [vmem:[#allocation2] sm:$0xff]
          %v437 = vld [vmem:[#allocation2 + $0x8] sm:$0xff]
          %v438 = vld [vmem:[%s2] sm:$0x3]
          %v440 = vlaneseq
          %v441 = vshrl.u32 %v440, 7
          %v442 = vsub.s32 0, %v441
          %v443 = vrot.slane %v438, %v442
          %v444 = vlaneseq
          %v445 = vshrl.u32 %v444, 7
          %v446 = vsub.s32 1, %v445
          %v447 = vrot.slane %v438, %v446
          %v450 = vadd.f32 %v436, %v443
          %v451 = vadd.f32 %v437, %v447
          %v452 = vtanh.pop %v450
          %v453 = vtanh.pop %v451
          %v454 = vld [vmem:[#allocation3] sm:$0xff]
          %v455 = vld [vmem:[#allocation3 + $0x8] sm:$0xff]
          %v456 = vld [vmem:[#allocation3 + $0x10] sm:$0xff]
          %v457 = vld [vmem:[#allocation3 + $0x18] sm:$0xff]
          %v458 = vld [vmem:[#allocation3 + $0x20] sm:$0xff]
          %v459 = vld [vmem:[#allocation3 + $0x28] sm:$0xff]
          %v460 = vld [vmem:[#allocation3 + $0x30] sm:$0xff]
          %v461 = vld [vmem:[#allocation3 + $0x38] sm:$0xff]
          %v462 = vld [vmem:[#allocation3 + $0x40] sm:$0xff]
          %v463 = vld [vmem:[#allocation3 + $0x48] sm:$0xff]
          %v464 = vld [vmem:[#allocation3 + $0x50] sm:$0xff]
          %v465 = vld [vmem:[#allocation3 + $0x58] sm:$0xff]
          %v466 = vld [vmem:[#allocation3 + $0x60] sm:$0xff]
          %v467 = vld [vmem:[#allocation3 + $0x68] sm:$0xff]
          %v468 = vld [vmem:[#allocation3 + $0x70] sm:$0xff]
          %v469 = vld [vmem:[#allocation3 + $0x78] sm:$0xff]
          %v470 = vld [vmem:[#allocation3 + $0x80] sm:$0xff]
          %v471 = vld [vmem:[#allocation3 + $0x88] sm:$0xff]
          %v472 = vld [vmem:[#allocation3 + $0x90] sm:$0xff]
          %v473 = vld [vmem:[#allocation3 + $0x98] sm:$0xff]
          %v474 = vld [vmem:[#allocation3 + $0xa0] sm:$0xff]
          %v475 = vld [vmem:[#allocation3 + $0xa8] sm:$0xff]
          %v476 = vld [vmem:[#allocation3 + $0xb0] sm:$0xff]
          %v477 = vld [vmem:[#allocation3 + $0xb8] sm:$0xff]
          %v478 = vld [vmem:[#allocation3 + $0xc0] sm:$0xff]
          %v479 = vld [vmem:[#allocation3 + $0xc8] sm:$0xff]
          %v480 = vld [vmem:[#allocation3 + $0xd0] sm:$0xff]
          %v481 = vld [vmem:[#allocation3 + $0xd8] sm:$0xff]
          %v482 = vld [vmem:[#allocation3 + $0xe0] sm:$0xff]
          %v483 = vld [vmem:[#allocation3 + $0xe8] sm:$0xff]
          %v484 = vld [vmem:[#allocation3 + $0xf0] sm:$0xff]
          %v485 = vld [vmem:[#allocation3 + $0xf8] sm:$0xff]
          %v486 = vld [vmem:[%s4] sm:$0x1]
          %v488 = vlaneseq
          %v489 = vshrl.u32 %v488, 7
          %v490 = vsub.s32 0, %v489
          %v491 = vrot.slane %v486, %v490
          %493 = vmatprep.subr.mxu0 0.0
          %494 = vmatpush1.msra.mxu0 %v469
          %495 = vmatprep.subr.mxu0 0.0
          %496 = vmatpush1.msra.mxu0 %v468
          %497 = vmatprep.subr.mxu0 0.0
          %498 = vmatpush1.msra.mxu0 %v467
          %499 = vmatprep.subr.mxu0 0.0
          %500 = vmatpush1.msra.mxu0 %v466
          %501 = vmatprep.subr.mxu0 0.0
          %502 = vmatpush1.msra.mxu0 %v465
          %503 = vmatprep.subr.mxu0 0.0
          %504 = vmatpush1.msra.mxu0 %v464
          %505 = vmatprep.subr.mxu0 0.0
          %506 = vmatpush1.msra.mxu0 %v463
          %507 = vmatprep.subr.mxu0 0.0
          %508 = vmatpush1.msra.mxu0 %v462
          %509 = vmatprep.subr.mxu0 0.0
          %510 = vmatpush1.msra.mxu0 %v461
          %511 = vmatprep.subr.mxu0 0.0
          %512 = vmatpush1.msra.mxu0 %v460
          %513 = vmatprep.subr.mxu0 0.0
          %514 = vmatpush1.msra.mxu0 %v459
          %515 = vmatprep.subr.mxu0 0.0
          %516 = vmatpush1.msra.mxu0 %v458
          %517 = vmatprep.subr.mxu0 0.0
          %518 = vmatpush1.msra.mxu0 %v457
          %519 = vmatprep.subr.mxu0 0.0
          %520 = vmatpush1.msra.mxu0 %v456
          %521 = vmatprep.subr.mxu0 0.0
          %522 = vmatpush1.msra.mxu0 %v455
          %523 = vmatprep.subr.mxu0 0.0
          %524 = vmatpush1.msra.mxu0 %v454
          %525 = vmatprep.subr.mxu0 0.0
          %526 = vmatpush2.msra.mxu0 %v485
          %527 = vmatprep.subr.mxu0 0.0
          %528 = vmatpush2.msra.mxu0 %v484
          %529 = vmatprep.subr.mxu0 0.0
          %530 = vmatpush2.msra.mxu0 %v483
          %531 = vmatprep.subr.mxu0 0.0
          %532 = vmatpush2.msra.mxu0 %v482
          %533 = vmatprep.subr.mxu0 0.0
          %534 = vmatpush2.msra.mxu0 %v481
          %535 = vmatprep.subr.mxu0 0.0
          %536 = vmatpush2.msra.mxu0 %v480
          %537 = vmatprep.subr.mxu0 0.0
          %538 = vmatpush2.msra.mxu0 %v479
          %539 = vmatprep.subr.mxu0 0.0
          %540 = vmatpush2.msra.mxu0 %v478
          %541 = vmatprep.subr.mxu0 0.0
          %542 = vmatpush2.msra.mxu0 %v477
          %543 = vmatprep.subr.mxu0 0.0
          %544 = vmatpush2.msra.mxu0 %v476
          %545 = vmatprep.subr.mxu0 0.0
          %546 = vmatpush2.msra.mxu0 %v475
          %547 = vmatprep.subr.mxu0 0.0
          %548 = vmatpush2.msra.mxu0 %v474
          %549 = vmatprep.subr.mxu0 0.0
          %550 = vmatpush2.msra.mxu0 %v473
          %551 = vmatprep.subr.mxu0 0.0
          %552 = vmatpush2.msra.mxu0 %v472
          %553 = vmatprep.subr.mxu0 0.0
          %554 = vmatpush2.msra.mxu0 %v471
          %555 = vmatprep.subr.mxu0 0.0
          %556 = vmatpush2.msra.mxu0 %v470
          %557 = vmatprep.mubr.f32.mxu0 %v453
          %558 = vmatmul.mubr.f32.gmra.mxu0 %v452
          %v559 = vpop.f32.mrf.mxu0
          %v560 = vadd.f32 %v491, %v559
          %v561 = vpop.f32.mrf.mxu0
          %562 = vdwg.mxu0
          %v563 = vtanh.pop %v560
          %v564 = vld [vmem:[%s5] sm:$0xff]
          %v565 = vld [vmem:[%s5 + $0x8] sm:$0xff]
          %v566 = vld [vmem:[%s5 + $0x10] sm:$0xff]
          %v567 = vld [vmem:[%s5 + $0x18] sm:$0xff]
          %v568 = vld [vmem:[%s5 + $0x20] sm:$0xff]
          %v569 = vld [vmem:[%s5 + $0x28] sm:$0xff]
          %v570 = vld [vmem:[%s5 + $0x30] sm:$0xff]
          %v571 = vld [vmem:[%s5 + $0x38] sm:$0xff]
          %v572 = vld [vmem:[%s5 + $0x40] sm:$0xff]
          %v573 = vld [vmem:[%s5 + $0x48] sm:$0xff]
          %v574 = vld [vmem:[%s5 + $0x50] sm:$0xff]
          %v575 = vld [vmem:[%s5 + $0x58] sm:$0xff]
          %v576 = vld [vmem:[%s5 + $0x60] sm:$0xff]
          %v577 = vld [vmem:[%s5 + $0x68] sm:$0xff]
          %v578 = vld [vmem:[%s5 + $0x70] sm:$0xff]
          %v579 = vld [vmem:[%s5 + $0x78] sm:$0xff]
          %v580 = vld [vmem:[%s6] sm:$0x1]
          %v582 = vlaneseq
          %v583 = vshrl.u32 %v582, 7
          %v584 = vsub.s32 0, %v583
          %v585 = vrot.slane %v580, %v584
          %587 = vmatprep.subr.mxu0 0.0
          %588 = vmatpush1.msra.mxu0 %v579
          %589 = vmatprep.subr.mxu0 0.0
          %590 = vmatpush1.msra.mxu0 %v578
          %591 = vmatprep.subr.mxu0 0.0
          %592 = vmatpush1.msra.mxu0 %v577
          %593 = vmatprep.subr.mxu0 0.0
          %594 = vmatpush1.msra.mxu0 %v576
          %595 = vmatprep.subr.mxu0 0.0
          %596 = vmatpush1.msra.mxu0 %v575
          %597 = vmatprep.subr.mxu0 0.0
          %598 = vmatpush1.msra.mxu0 %v574
          %599 = vmatprep.subr.mxu0 0.0
          %600 = vmatpush1.msra.mxu0 %v573
          %601 = vmatprep.subr.mxu0 0.0
          %602 = vmatpush1.msra.mxu0 %v572
          %603 = vmatprep.subr.mxu0 0.0
          %604 = vmatpush1.msra.mxu0 %v571
          %605 = vmatprep.subr.mxu0 0.0
          %606 = vmatpush1.msra.mxu0 %v570
          %607 = vmatprep.subr.mxu0 0.0
          %608 = vmatpush1.msra.mxu0 %v569
          %609 = vmatprep.subr.mxu0 0.0
          %610 = vmatpush1.msra.mxu0 %v568
          %611 = vmatprep.subr.mxu0 0.0
          %612 = vmatpush1.msra.mxu0 %v567
          %613 = vmatprep.subr.mxu0 0.0
          %614 = vmatpush1.msra.mxu0 %v566
          %615 = vmatprep.subr.mxu0 0.0
          %616 = vmatpush1.msra.mxu0 %v565
          %617 = vmatprep.subr.mxu0 0.0
          %618 = vmatpush1.msra.mxu0 %v564
          %619 = vmatprep.subr.mxu0 0.0
          %620 = vmatpush2.msra.mxu0 0.0
          %621 = vmatprep.subr.mxu0 0.0
          %622 = vmatpush2.msra.mxu0 0.0
          %623 = vmatprep.subr.mxu0 0.0
          %624 = vmatpush2.msra.mxu0 0.0
          %625 = vmatprep.subr.mxu0 0.0
          %626 = vmatpush2.msra.mxu0 0.0
          %627 = vmatprep.subr.mxu0 0.0
          %628 = vmatpush2.msra.mxu0 0.0
          %629 = vmatprep.subr.mxu0 0.0
          %630 = vmatpush2.msra.mxu0 0.0
          %631 = vmatprep.subr.mxu0 0.0
          %632 = vmatpush2.msra.mxu0 0.0
          %633 = vmatprep.subr.mxu0 0.0
          %634 = vmatpush2.msra.mxu0 0.0
          %635 = vmatprep.subr.mxu0 0.0
          %636 = vmatpush2.msra.mxu0 0.0
          %637 = vmatprep.subr.mxu0 0.0
          %638 = vmatpush2.msra.mxu0 0.0
          %639 = vmatprep.subr.mxu0 0.0
          %640 = vmatpush2.msra.mxu0 0.0
          %641 = vmatprep.subr.mxu0 0.0
          %642 = vmatpush2.msra.mxu0 0.0
          %643 = vmatprep.subr.mxu0 0.0
          %644 = vmatpush2.msra.mxu0 0.0
          %645 = vmatprep.subr.mxu0 0.0
          %646 = vmatpush2.msra.mxu0 0.0
          %647 = vmatprep.subr.mxu0 0.0
          %648 = vmatpush2.msra.mxu0 0.0
          %649 = vmatprep.subr.mxu0 0.0
          %650 = vmatpush2.msra.mxu0 0.0
          %651 = vmatprep.mubr.f32.mxu0 0.0
          %652 = vmatmul.mubr.f32.gmra.mxu0 %v563
          %v653 = vpop.f32.mrf.mxu0
          %v654 = vadd.f32 %v585, %v653
          %v655 = vpop.f32.mrf.mxu0
          %656 = vdwg.mxu0
          %657 = vst.msk [vmem:[%s322] sm:$0xff] %vm354, %v654
        $region60: #{question_encoder_bow.1} parent=47 // pred_fallthru
          _
        %s658 = sand.u32 %s201, 1
        %s659 = scalar_lea.sflag [#allocation5], %s658
        %s660 = sand.u32 %s201, 1
        %s661 = smul.addr %s660, 8
        %s662 = scalar_lea.vmem [#allocation6], %s661
        // Predicated region
        $region61: #{question_encoder_bow.1} parent=47 // pred_check
          %p663 = pneg %p211
        $region62: #{question_encoder_bow.1} parent=47 // pred_check_branch
          %665 = sbr.rel (%p663) target = $region64
        $region63: #{question_encoder_bow.1} parent=47 // pred_region
          %s667 = ssub.s32 128, 128
          %668 = vsyncadd %s659, %s667
          %s669 = smul.addr %s26, 128
          %s670 = scalar_lea.hbm %s7, %s669
          %s672 = sshll.u32 %s662, 4
          %s673 = int_to_ptr.vmem [resolvable:$true] %s672
          %675 = dma.vmem_to_hbm [thread:$0]  %s673, 128, %s670, %s659
        $region64: #{question_encoder_bow.1} parent=47 // pred_fallthru
          _
      $region48: #{question_encoder_bow.1} parent=5 // pred_fallthru
        _
      %p676 = scmp.le.s32.totalorder 2, %s17
      // Predicated region
      $region65: #{question_encoder_bow.1} parent=5 // pred_check
        %p677 = pneg %p676
      $region66: #{question_encoder_bow.1} parent=5 // pred_check_branch
        %679 = sbr.rel (%p677) target = $region68
      $region67: #{question_encoder_bow.1} parent=5 // pred_region
        %s680 = ssub.s32 %s17, 2
        // Predicated region
        $region69: #{question_encoder_bow.1} parent=67 // pred_check
          %p681 = pneg %p217
        $region70: #{question_encoder_bow.1} parent=67 // pred_check_branch
          %683 = sbr.rel (%p681) target = $region72
        $region71: #{question_encoder_bow.1} parent=67 // pred_region
          %s684 = sand.u32 %s202, 1
          %s685 = scalar_lea.sflag [#allocation5], %s684
          %s686 = sand.u32 %s202, 1
          %s687 = smul.addr %s686, 8
          %s688 = scalar_lea.vmem [#allocation6], %s687
          %689 = dma.done %s685, 128
        $region72: #{question_encoder_bow.1} parent=67 // pred_fallthru
          _
      $region68: #{question_encoder_bow.1} parent=5 // pred_fallthru
        _
    $region6: #{question_encoder_bow.1} parent=1 // loop_footer
      %s21 = sadd.s32 1, %s17
    $region7: #{question_encoder_bow.1} parent=1 // loop_footer_branch
      %16 = sbr.rel target = $region3
    $region8: #{question_encoder_bow.1} parent=1 // loop_exit
      _
    %690 = vsyncpa [#allocation4], 1
    %s691 = scalar_lea.sflag [#allocation4], 1
    %692 = vsyncpa %s691, 1
    %693 = vsyncpa [#allocation5], 1
    %s694 = scalar_lea.sflag [#allocation5], 1
    %695 = vsyncpa %s694, 1

</llo_original>
